<compile_context>
chip_gen: v6e
topology: v6e:2x2x1
jax: 0.10.0
libtpu: 0.0.40
codegen_flags: <defaults>
</compile_context>

<pallas_src>
import jax
import jax.numpy as jnp
from jax.experimental import pallas as pl
from jax.experimental.pallas import tpu as pltpu

# Scaled-down hidden sizes (real model: 768 / 768 / 512 -> combined 2048).
BERT_H, XLMR_H, MT5_H = 128, 128, 128
COMBINED = BERT_H + XLMR_H + MT5_H          # 384
HALF = COMBINED // 2                        # 192  (nn.Linear out_features)
HALF_PAD = 256                              # padded to MXU/lane-friendly size
NUM_LABELS = 2
OUT_PAD = 128                               # lane-dense padded logits width
B_BLOCK_MAX = 256                           # rows per grid step (large batches)
BATCH = 2
SEQ = 8
VOCAB = 64


def classifier_kernel(x_ref, w1_ref, w2_ref, bias_ref, out_ref):
    # Layer 1: single K=384 bf16 MXU dot, f32 accumulation.
    h = jnp.dot(x_ref[...], w1_ref[...], preferred_element_type=jnp.float32)
    # Bias + ReLU on the f32 accumulator (Dropouts are identity at inference).
    h = jnp.maximum(h + bias_ref[0:1, :], 0.0)               # (b_block, HALF_PAD)

    # Layer 2: lane-dense padded projection (HALF_PAD -> OUT_PAD), bf16 MXU
    # inputs, f32 accumulation.  Padded rows/cols carry zero weight/bias.
    logits = jnp.dot(h.astype(jnp.bfloat16), w2_ref[...],
                     preferred_element_type=jnp.float32)
    out_ref[...] = logits + bias_ref[1:2, 0:OUT_PAD]          # (b_block, OUT_PAD)


def prepare_head_params(params):
    """One-time preprocessing: zero-pad + bf16-cast weights, pack biases.

    Done once at init so the per-forward path does no weight padding/casting.
    """
    w1_p = jnp.pad(params["w1"],
                   ((0, 0), (0, HALF_PAD - HALF))).astype(jnp.bfloat16)
    w2_p = jnp.pad(params["w2"],
                   ((0, HALF_PAD - HALF),
                    (0, OUT_PAD - NUM_LABELS))).astype(jnp.bfloat16)
    b1_p = jnp.pad(params["b1"], ((0, 0), (0, HALF_PAD - HALF)))           # (1, 256)
    b2_p = jnp.pad(params["b2"], ((0, 0), (0, HALF_PAD - NUM_LABELS)))     # (1, 256)
    biases = jnp.concatenate([b1_p, b2_p], axis=0)                         # (2, 256) f32
    return {"w1_p": w1_p, "w2_p": w2_p, "biases": biases}


def classifier_head(combined, w1_p, w2_p, biases):
    """Pad activations, run the Pallas head, un-pad."""
    batch = combined.shape[0]
    # bf16 packs 16 sublanes/vreg -> pad batch to a multiple of 16; for large
    # batches tile into B_BLOCK_MAX-row grid steps (parallel across TCs on v7x).
    b_min = ((batch + 15) // 16) * 16
    b_block = min(b_min, B_BLOCK_MAX)
    b_pad = ((b_min + b_block - 1) // b_block) * b_block

    x = jnp.pad(combined, ((0, b_pad - batch), (0, 0))).astype(jnp.bfloat16)

    out_padded = pl.pallas_call(
        classifier_kernel,
        out_shape=jax.ShapeDtypeStruct((b_pad, OUT_PAD), jnp.float32),
        grid=(b_pad // b_block,),
        in_specs=[
            pl.BlockSpec((b_block, COMBINED), lambda i: (i, 0)),
            pl.BlockSpec((COMBINED, HALF_PAD), lambda i: (0, 0)),
            pl.BlockSpec((HALF_PAD, OUT_PAD), lambda i: (0, 0)),
            pl.BlockSpec((2, HALF_PAD), lambda i: (0, 0)),
        ],
        out_specs=pl.BlockSpec((b_block, OUT_PAD), lambda i: (i, 0)),
        compiler_params=pltpu.CompilerParams(
            dimension_semantics=("parallel",)),
    )(x, w1_p, w2_p, biases)

    return out_padded[:batch, :NUM_LABELS]


def toy_encoder_cls(input_ids, attention_mask, embedding):
    # TODO(synk): pretrained BERT / XLM-R / mT5 encoders have no Pallas
    # equivalent here; a deterministic embedding lookup stands in for
    # last_hidden_state's CLS (position 0) token, like the reference forward.
    # attention_mask does not affect position 0.
    del attention_mask
    return jnp.take(embedding, input_ids[:, 0], axis=0)       # (B, H) -- gather CLS only


def multi_encoder_classifier_forward(params, head_params,
                                     input_ids_bert, attention_mask_bert,
                                     input_ids_xlmr, attention_mask_xlmr,
                                     input_ids_mt5, attention_mask_mt5):
    bert_cls = toy_encoder_cls(input_ids_bert, attention_mask_bert, params["bert_emb"])
    xlmr_cls = toy_encoder_cls(input_ids_xlmr, attention_mask_xlmr, params["xlmr_emb"])
    mt5_cls = toy_encoder_cls(input_ids_mt5, attention_mask_mt5, params["mt5_emb"])
    combined = jnp.concatenate([bert_cls, xlmr_cls, mt5_cls], axis=1)   # (B, 384)
    return classifier_head(combined, head_params["w1_p"],
                           head_params["w2_p"], head_params["biases"])


def init_params(key):
    k = jax.random.split(key, 7)
    scale1 = 1.0 / jnp.sqrt(COMBINED)
    scale2 = 1.0 / jnp.sqrt(HALF)
    return {
        "bert_emb": jax.random.normal(k[0], (VOCAB, BERT_H), jnp.float32) * 0.02,
        "xlmr_emb": jax.random.normal(k[1], (VOCAB, XLMR_H), jnp.float32) * 0.02,
        "mt5_emb":  jax.random.normal(k[2], (VOCAB, MT5_H), jnp.float32) * 0.02,
        # Linear 1: (COMBINED -> HALF), stored (in, out); bias kept 2D for TPU layout.
        "w1": jax.random.normal(k[3], (COMBINED, HALF), jnp.float32) * scale1,
        "b1": jax.random.normal(k[4], (1, HALF), jnp.float32) * scale1,
        # Linear 2: (HALF -> NUM_LABELS)
        "w2": jax.random.normal(k[5], (HALF, NUM_LABELS), jnp.float32) * scale2,
        "b2": jax.random.normal(k[6], (1, NUM_LABELS), jnp.float32) * scale2,
    }


if __name__ == "__main__":
    key = jax.random.PRNGKey(0)
    pkey, dkey = jax.random.split(key)
    params = init_params(pkey)
    head_params = prepare_head_params(params)      # one-time pad + bf16 cast

    dk = jax.random.split(dkey, 3)
    input_ids_bert = jax.random.randint(dk[0], (BATCH, SEQ), 0, VOCAB, jnp.int32)
    input_ids_xlmr = jax.random.randint(dk[1], (BATCH, SEQ), 0, VOCAB, jnp.int32)
    input_ids_mt5 = jax.random.randint(dk[2], (BATCH, SEQ), 0, VOCAB, jnp.int32)
    mask = jnp.ones((BATCH, SEQ), jnp.int32)

    fwd = jax.jit(multi_encoder_classifier_forward)
    logits = fwd(params, head_params,
                 input_ids_bert, mask,
                 input_ids_xlmr, mask,
                 input_ids_mt5, mask)
    logits = jax.block_until_ready(logits)

    # Cross-check the Pallas head against a pure-f32 JAX reference.
    bert_cls = toy_encoder_cls(input_ids_bert, mask, params["bert_emb"])
    xlmr_cls = toy_encoder_cls(input_ids_xlmr, mask, params["xlmr_emb"])
    mt5_cls = toy_encoder_cls(input_ids_mt5, mask, params["mt5_emb"])
    combined = jnp.concatenate([bert_cls, xlmr_cls, mt5_cls], axis=1)
    ref = jnp.maximum(combined @ params["w1"] + params["b1"], 0.0) @ params["w2"] + params["b2"]

    assert logits.shape == (BATCH, NUM_LABELS)
    # bf16 matmul inputs with f32 accumulation -> loosened tolerance.
    assert jnp.allclose(logits, ref, atol=1e-2, rtol=2e-2), (
        f"max abs err {jnp.max(jnp.abs(logits - ref))}")

    print("KERNEL_OK")
</pallas_src>

<mosaic_0001>
module attributes {stable_mosaic.version = 11 : i64} {
  func.func @classifier_kernel(%arg0: i32, %arg1: memref<16x384xbf16, #tpu.memory_space<vmem>>, %arg2: memref<384x256xbf16, #tpu.memory_space<vmem>>, %arg3: memref<256x128xbf16, #tpu.memory_space<vmem>>, %arg4: memref<2x256xf32, #tpu.memory_space<vmem>>, %arg5: memref<16x128xf32, #tpu.memory_space<vmem>>) attributes {dimension_semantics = [#tpu.dimension_semantics<parallel>], iteration_bounds = array<i64: 1>, scalar_prefetch = 0 : i64, scratch_operands = 0 : i64, tpu.core_type = #tpu.core_type<tc>, window_params = [{transform_indices = @transform_0, window_bounds = array<i64: 16, 384>}, {pipeline_mode = #tpu.pipeline_mode<synchronous>, transform_indices = @transform_1, window_bounds = array<i64: 384, 256>}, {pipeline_mode = #tpu.pipeline_mode<synchronous>, transform_indices = @transform_2, window_bounds = array<i64: 256, 128>}, {pipeline_mode = #tpu.pipeline_mode<synchronous>, transform_indices = @transform_3, window_bounds = array<i64: 2, 256>}, {transform_indices = @transform_4, window_bounds = array<i64: 16, 128>}]} {
    %c0 = arith.constant 0 : index
    %c0_0 = arith.constant 0 : index
    %0 = vector.load %arg1[%c0, %c0_0] : memref<16x384xbf16, #tpu.memory_space<vmem>>, vector<16x384xbf16>
    %c0_1 = arith.constant 0 : index
    %c0_2 = arith.constant 0 : index
    %1 = vector.load %arg2[%c0_1, %c0_2] : memref<384x256xbf16, #tpu.memory_space<vmem>>, vector<384x256xbf16>
    %cst = arith.constant dense<0.000000e+00> : vector<16x256xf32>
    %2 = tpu.matmul %0, %1, %cst {dimension_numbers = #tpu.dot_dimension_numbers<[1], [0], [0], [1], [0, 0, 1, 1], [], []>} : vector<16x384xbf16>, vector<384x256xbf16>, vector<16x256xf32> -> vector<16x256xf32>
    %c0_3 = arith.constant 0 : index
    %c0_4 = arith.constant 0 : index
    %3 = vector.load %arg4[%c0_3, %c0_4] : memref<2x256xf32, #tpu.memory_space<vmem>>, vector<1x256xf32>
    %4 = vector.broadcast %3 : vector<1x256xf32> to vector<16x256xf32>
    %5 = arith.addf %2, %4 : vector<16x256xf32>
    %cst_5 = arith.constant 0.000000e+00 : f32
    %6 = vector.broadcast %cst_5 : f32 to vector<16x256xf32>
    %7 = arith.maximumf %5, %6 : vector<16x256xf32>
    %8 = arith.truncf %7 : vector<16x256xf32> to vector<16x256xbf16>
    %c0_6 = arith.constant 0 : index
    %c0_7 = arith.constant 0 : index
    %9 = vector.load %arg3[%c0_6, %c0_7] : memref<256x128xbf16, #tpu.memory_space<vmem>>, vector<256x128xbf16>
    %cst_8 = arith.constant dense<0.000000e+00> : vector<16x128xf32>
    %10 = tpu.matmul %8, %9, %cst_8 {dimension_numbers = #tpu.dot_dimension_numbers<[1], [0], [0], [1], [0, 0, 1, 1], [], []>} : vector<16x256xbf16>, vector<256x128xbf16>, vector<16x128xf32> -> vector<16x128xf32>
    %c1 = arith.constant 1 : index
    %c0_9 = arith.constant 0 : index
    %11 = vector.load %arg4[%c1, %c0_9] : memref<2x256xf32, #tpu.memory_space<vmem>>, vector<1x128xf32>
    %12 = vector.broadcast %11 : vector<1x128xf32> to vector<16x128xf32>
    %13 = arith.addf %10, %12 : vector<16x128xf32>
    %c0_10 = arith.constant 0 : index
    %c0_11 = arith.constant 0 : index
    %14 = vector.load %arg5[%c0_10, %c0_11] : memref<16x128xf32, #tpu.memory_space<vmem>>, vector<16x128xf32>
    tpu.vector_store %arg5[%c0_10, %c0_11], %13 {strides = array<i32>} : memref<16x128xf32, #tpu.memory_space<vmem>>, vector<16x128xf32>,
    return
  }
  func.func @transform_0(%arg0: i32) -> (i32, i32) {
    %c0_i32 = arith.constant 0 : i32
    %c0_i32_0 = arith.constant 0 : i32
    return %arg0, %c0_i32 : i32, i32
  }
  func.func @transform_1(%arg0: i32) -> (i32, i32) {
    %c0_i32 = arith.constant 0 : i32
    %c0_i32_0 = arith.constant 0 : i32
    %c0_i32_1 = arith.constant 0 : i32
    return %c0_i32, %c0_i32_0 : i32, i32
  }
  func.func @transform_2(%arg0: i32) -> (i32, i32) {
    %c0_i32 = arith.constant 0 : i32
    %c0_i32_0 = arith.constant 0 : i32
    %c0_i32_1 = arith.constant 0 : i32
    return %c0_i32, %c0_i32_0 : i32, i32
  }
  func.func @transform_3(%arg0: i32) -> (i32, i32) {
    %c0_i32 = arith.constant 0 : i32
    %c0_i32_0 = arith.constant 0 : i32
    %c0_i32_1 = arith.constant 0 : i32
    return %c0_i32, %c0_i32_0 : i32, i32
  }
  func.func @transform_4(%arg0: i32) -> (i32, i32) {
    %c0_i32 = arith.constant 0 : i32
    %c0_i32_0 = arith.constant 0 : i32
    return %arg0, %c0_i32 : i32, i32
  }
}

</mosaic_0001>

<llo_original>
// kernel: multi_encoder_classifier_forward.1
$region0: #{multi_encoder_classifier_forward.1}
  #allocation0 [shape = 'u32[]', space=smem, size = 0x4, offset = 0x4, fixed_abs, tag = 'smem constant byte address 0x4 - core index']
  #allocation1 [shape = 'u32[144,128]{1,0:T(1,128)}', space=vmem, size = 0x12000, scoped, tag = 'internal scratch']
  %s0 = inlined_call_operand.vmem [shape: bf16[16,384], index: 0, kind: input, shape index: {}]
  %s1 = inlined_call_operand.hbm [shape: bf16[384,256], index: 1, kind: input, shape index: {}]
  %s2 = inlined_call_operand.hbm [shape: bf16[256,128], index: 2, kind: input, shape index: {}]
  %s3 = inlined_call_operand.vmem [shape: f32[2,256], index: 3, kind: input, shape index: {}]
  %s4 = inlined_call_operand.vmem [shape: f32[16,128], index: 4, kind: output, shape index: {}]
  %s5 = sld [smem:[#allocation0]]
  $region34: #{multi_encoder_classifier_forward.1} parent=0
    _
  %s7 = ssub.s32 1, %s5
  %s8 = scalar_select 0, %s7, %s5
  $region1: #{multi_encoder_classifier_forward.1} parent=0
    #allocation2 [shape = 'u8[196608]{0}', space=vmem, size = 0x30000, scoped, tag = 'input window, operand 1, single buffered']
    #allocation3 [shape = 's32[1]{0}', space=sflag, size = 0x4, scoped, tag = 'scoped memory for multi_encoder_classifier_forward.1']
    #allocation4 [shape = 'u8[65536]{0}', space=vmem, size = 0x10000, scoped, tag = 'input window, operand 2, single buffered']
    #allocation5 [shape = 's32[1]{0}', space=sflag, size = 0x4, scoped, tag = 'scoped memory for multi_encoder_classifier_forward.1']
    %9 = vsyncpa [#allocation3], 0
    %10 = vsyncpa [#allocation5], 0
    // Predicated region
    $region2: #{multi_encoder_classifier_forward.1} parent=1 // pred_check
      _
    $region3: #{multi_encoder_classifier_forward.1} parent=1 // pred_check_branch
      %12 = sbr.rel (0) target = $region5
    $region4: #{multi_encoder_classifier_forward.1} parent=1 // pred_region
      _
    $region5: #{multi_encoder_classifier_forward.1} parent=1 // pred_fallthru
      _
    // Predicated region
    $region6: #{multi_encoder_classifier_forward.1} parent=1 // pred_check
      _
    $region7: #{multi_encoder_classifier_forward.1} parent=1 // pred_check_branch
      %14 = sbr.rel (0) target = $region9
    $region8: #{multi_encoder_classifier_forward.1} parent=1 // pred_region
      %s16 = ssub.s32 6144, 6144
      %17 = vsyncadd [#allocation3], %s16
      %s18 = sshll.u32 [#allocation2], 4
      %s19 = int_to_ptr.vmem [resolvable:$true] %s18
      %24 = dma.hbm_to_vmem [thread:$0]  %s1, 6144, %s19, [#allocation3], 128, 128, 8
    $region9: #{multi_encoder_classifier_forward.1} parent=1 // pred_fallthru
      _
    // Predicated region
    $region10: #{multi_encoder_classifier_forward.1} parent=1 // pred_check
      _
    $region11: #{multi_encoder_classifier_forward.1} parent=1 // pred_check_branch
      %26 = sbr.rel (0) target = $region13
    $region12: #{multi_encoder_classifier_forward.1} parent=1 // pred_region
      %s28 = ssub.s32 2048, 2048
      %29 = vsyncadd [#allocation5], %s28
      %s30 = sshll.u32 [#allocation4], 4
      %s31 = int_to_ptr.vmem [resolvable:$true] %s30
      %36 = dma.hbm_to_vmem [thread:$0]  %s2, 2048, %s31, [#allocation5], 64, 64, 4
    $region13: #{multi_encoder_classifier_forward.1} parent=1 // pred_fallthru
      _
    // Predicated region
    $region14: #{multi_encoder_classifier_forward.1} parent=1 // pred_check
      _
    $region15: #{multi_encoder_classifier_forward.1} parent=1 // pred_check_branch
      %38 = sbr.rel (0) target = $region17
    $region16: #{multi_encoder_classifier_forward.1} parent=1 // pred_region
      _
    $region17: #{multi_encoder_classifier_forward.1} parent=1 // pred_fallthru
      _
    // Predicated region
    $region18: #{multi_encoder_classifier_forward.1} parent=1 // pred_check
      _
    $region19: #{multi_encoder_classifier_forward.1} parent=1 // pred_check_branch
      %40 = sbr.rel (0) target = $region21
    $region20: #{multi_encoder_classifier_forward.1} parent=1 // pred_region
      %41 = dma.done [#allocation3], 6144
    $region21: #{multi_encoder_classifier_forward.1} parent=1 // pred_fallthru
      _
    // Predicated region
    $region22: #{multi_encoder_classifier_forward.1} parent=1 // pred_check
      _
    $region23: #{multi_encoder_classifier_forward.1} parent=1 // pred_check_branch
      %43 = sbr.rel (0) target = $region25
    $region24: #{multi_encoder_classifier_forward.1} parent=1 // pred_region
      %44 = dma.done [#allocation5], 2048
    $region25: #{multi_encoder_classifier_forward.1} parent=1 // pred_fallthru
      _
    %v46 = vld [vmem:[%s0] sm:$0xff]
    %v47 = vld [vmem:[%s0 + $0x8] sm:$0xf]
    %v48 = vld [vmem:[%s0 + $0xc] sm:$0xff]
    %v49 = vld [vmem:[%s0 + $0x14] sm:$0xf]
    %v50 = vld [vmem:[#allocation2] sm:$0xff]
    %v51 = vld [vmem:[#allocation2 + $0x8] sm:$0xff]
    %v52 = vld [vmem:[#allocation2 + $0x10] sm:$0xff]
    %v53 = vld [vmem:[#allocation2 + $0x18] sm:$0xff]
    %v54 = vld [vmem:[#allocation2 + $0x20] sm:$0xff]
    %v55 = vld [vmem:[#allocation2 + $0x28] sm:$0xff]
    %v56 = vld [vmem:[#allocation2 + $0x30] sm:$0xff]
    %v57 = vld [vmem:[#allocation2 + $0x38] sm:$0xff]
    %v58 = vld [vmem:[#allocation2 + $0x40] sm:$0xff]
    %v59 = vld [vmem:[#allocation2 + $0x48] sm:$0xff]
    %v60 = vld [vmem:[#allocation2 + $0x50] sm:$0xff]
    %v61 = vld [vmem:[#allocation2 + $0x58] sm:$0xff]
    %v62 = vld [vmem:[#allocation2 + $0x60] sm:$0xff]
    %v63 = vld [vmem:[#allocation2 + $0x68] sm:$0xff]
    %v64 = vld [vmem:[#allocation2 + $0x70] sm:$0xff]
    %v65 = vld [vmem:[#allocation2 + $0x78] sm:$0xff]
    %v66 = vld [vmem:[#allocation2 + $0x80] sm:$0xff]
    %v67 = vld [vmem:[#allocation2 + $0x88] sm:$0xff]
    %v68 = vld [vmem:[#allocation2 + $0x90] sm:$0xff]
    %v69 = vld [vmem:[#allocation2 + $0x98] sm:$0xff]
    %v70 = vld [vmem:[#allocation2 + $0xa0] sm:$0xff]
    %v71 = vld [vmem:[#allocation2 + $0xa8] sm:$0xff]
    %v72 = vld [vmem:[#allocation2 + $0xb0] sm:$0xff]
    %v73 = vld [vmem:[#allocation2 + $0xb8] sm:$0xff]
    %v74 = vld [vmem:[#allocation2 + $0xc0] sm:$0xff]
    %v75 = vld [vmem:[#allocation2 + $0xc8] sm:$0xff]
    %v76 = vld [vmem:[#allocation2 + $0xd0] sm:$0xff]
    %v77 = vld [vmem:[#allocation2 + $0xd8] sm:$0xff]
    %v78 = vld [vmem:[#allocation2 + $0xe0] sm:$0xff]
    %v79 = vld [vmem:[#allocation2 + $0xe8] sm:$0xff]
    %v80 = vld [vmem:[#allocation2 + $0xf0] sm:$0xff]
    %v81 = vld [vmem:[#allocation2 + $0xf8] sm:$0xff]
    %v82 = vld [vmem:[#allocation2 + $0x100] sm:$0xff]
    %v83 = vld [vmem:[#allocation2 + $0x108] sm:$0xff]
    %v84 = vld [vmem:[#allocation2 + $0x110] sm:$0xff]
    %v85 = vld [vmem:[#allocation2 + $0x118] sm:$0xff]
    %v86 = vld [vmem:[#allocation2 + $0x120] sm:$0xff]
    %v87 = vld [vmem:[#allocation2 + $0x128] sm:$0xff]
    %v88 = vld [vmem:[#allocation2 + $0x130] sm:$0xff]
    %v89 = vld [vmem:[#allocation2 + $0x138] sm:$0xff]
    %v90 = vld [vmem:[#allocation2 + $0x140] sm:$0xff]
    %v91 = vld [vmem:[#allocation2 + $0x148] sm:$0xff]
    %v92 = vld [vmem:[#allocation2 + $0x150] sm:$0xff]
    %v93 = vld [vmem:[#allocation2 + $0x158] sm:$0xff]
    %v94 = vld [vmem:[#allocation2 + $0x160] sm:$0xff]
    %v95 = vld [vmem:[#allocation2 + $0x168] sm:$0xff]
    %v96 = vld [vmem:[#allocation2 + $0x170] sm:$0xff]
    %v97 = vld [vmem:[#allocation2 + $0x178] sm:$0xff]
    %v98 = vld [vmem:[%s3] ss:$2 sm:$0x3]
    %v100 = vlaneseq
    %v101 = vshrl.u32 %v100, 7
    %v102 = vsub.s32 0, %v101
    %v103 = vrot.slane %v98, %v102
    %v104 = vlaneseq
    %v105 = vshrl.u32 %v104, 7
    %v106 = vsub.s32 1, %v105
    %v107 = vrot.slane %v98, %v106
    %v114 = vunpack.c.l.b16 %v46
    %v115 = vunpack.c.h.b16 %v46
    %v116 = vunpack.c.l.b16 %v47
    %v117 = vunpack.c.l.b16 %v48
    %v118 = vunpack.c.h.b16 %v48
    %v119 = vunpack.c.l.b16 %v49
    %v120 = vpack.c.b16 %v117, %v114
    %v121 = vpack.c.b16 %v118, %v115
    %v122 = vpack.c.b16 %v119, %v116
    %v174 = vunpack.c.l.b16 %v50
    %v175 = vunpack.c.h.b16 %v50
    %v176 = vunpack.c.l.b16 %v51
    %v177 = vunpack.c.h.b16 %v51
    %v178 = vunpack.c.l.b16 %v52
    %v179 = vunpack.c.h.b16 %v52
    %v180 = vunpack.c.l.b16 %v53
    %v181 = vunpack.c.h.b16 %v53
    %v182 = vunpack.c.l.b16 %v54
    %v183 = vunpack.c.h.b16 %v54
    %v184 = vunpack.c.l.b16 %v55
    %v185 = vunpack.c.h.b16 %v55
    %v186 = vunpack.c.l.b16 %v56
    %v187 = vunpack.c.h.b16 %v56
    %v188 = vunpack.c.l.b16 %v57
    %v189 = vunpack.c.h.b16 %v57
    %v190 = vunpack.c.l.b16 %v58
    %v191 = vunpack.c.h.b16 %v58
    %v192 = vunpack.c.l.b16 %v59
    %v193 = vunpack.c.h.b16 %v59
    %v194 = vunpack.c.l.b16 %v60
    %v195 = vunpack.c.h.b16 %v60
    %v196 = vunpack.c.l.b16 %v61
    %v197 = vunpack.c.h.b16 %v61
    %v198 = vunpack.c.l.b16 %v62
    %v199 = vunpack.c.h.b16 %v62
    %v200 = vunpack.c.l.b16 %v63
    %v201 = vunpack.c.h.b16 %v63
    %v202 = vunpack.c.l.b16 %v64
    %v203 = vunpack.c.h.b16 %v64
    %v204 = vunpack.c.l.b16 %v65
    %v205 = vunpack.c.h.b16 %v65
    %v206 = vunpack.c.l.b16 %v66
    %v207 = vunpack.c.h.b16 %v66
    %v208 = vunpack.c.l.b16 %v67
    %v209 = vunpack.c.h.b16 %v67
    %v210 = vunpack.c.l.b16 %v68
    %v211 = vunpack.c.h.b16 %v68
    %v212 = vunpack.c.l.b16 %v69
    %v213 = vunpack.c.h.b16 %v69
    %v214 = vunpack.c.l.b16 %v70
    %v215 = vunpack.c.h.b16 %v70
    %v216 = vunpack.c.l.b16 %v71
    %v217 = vunpack.c.h.b16 %v71
    %v218 = vunpack.c.l.b16 %v72
    %v219 = vunpack.c.h.b16 %v72
    %v220 = vunpack.c.l.b16 %v73
    %v221 = vunpack.c.h.b16 %v73
    %v222 = vunpack.c.l.b16 %v74
    %v223 = vunpack.c.h.b16 %v74
    %v224 = vunpack.c.l.b16 %v75
    %v225 = vunpack.c.h.b16 %v75
    %v226 = vunpack.c.l.b16 %v76
    %v227 = vunpack.c.h.b16 %v76
    %v228 = vunpack.c.l.b16 %v77
    %v229 = vunpack.c.h.b16 %v77
    %v230 = vunpack.c.l.b16 %v78
    %v231 = vunpack.c.h.b16 %v78
    %v232 = vunpack.c.l.b16 %v79
    %v233 = vunpack.c.h.b16 %v79
    %v234 = vunpack.c.l.b16 %v80
    %v235 = vunpack.c.h.b16 %v80
    %v236 = vunpack.c.l.b16 %v81
    %v237 = vunpack.c.h.b16 %v81
    %v238 = vunpack.c.l.b16 %v82
    %v239 = vunpack.c.h.b16 %v82
    %v240 = vunpack.c.l.b16 %v83
    %v241 = vunpack.c.h.b16 %v83
    %v242 = vunpack.c.l.b16 %v84
    %v243 = vunpack.c.h.b16 %v84
    %v244 = vunpack.c.l.b16 %v85
    %v245 = vunpack.c.h.b16 %v85
    %v246 = vunpack.c.l.b16 %v86
    %v247 = vunpack.c.h.b16 %v86
    %v248 = vunpack.c.l.b16 %v87
    %v249 = vunpack.c.h.b16 %v87
    %v250 = vunpack.c.l.b16 %v88
    %v251 = vunpack.c.h.b16 %v88
    %v252 = vunpack.c.l.b16 %v89
    %v253 = vunpack.c.h.b16 %v89
    %v254 = vunpack.c.l.b16 %v90
    %v255 = vunpack.c.h.b16 %v90
    %v256 = vunpack.c.l.b16 %v91
    %v257 = vunpack.c.h.b16 %v91
    %v258 = vunpack.c.l.b16 %v92
    %v259 = vunpack.c.h.b16 %v92
    %v260 = vunpack.c.l.b16 %v93
    %v261 = vunpack.c.h.b16 %v93
    %v262 = vunpack.c.l.b16 %v94
    %v263 = vunpack.c.h.b16 %v94
    %v264 = vunpack.c.l.b16 %v95
    %v265 = vunpack.c.h.b16 %v95
    %v266 = vunpack.c.l.b16 %v96
    %v267 = vunpack.c.h.b16 %v96
    %v268 = vunpack.c.l.b16 %v97
    %v269 = vunpack.c.h.b16 %v97
    %v270 = vpack.c.b16 %v176, %v174
    %v271 = vpack.c.b16 %v177, %v175
    %v272 = vpack.c.b16 %v180, %v178
    %v273 = vpack.c.b16 %v181, %v179
    %v274 = vpack.c.b16 %v184, %v182
    %v275 = vpack.c.b16 %v185, %v183
    %v276 = vpack.c.b16 %v188, %v186
    %v277 = vpack.c.b16 %v189, %v187
    %v278 = vpack.c.b16 %v192, %v190
    %v279 = vpack.c.b16 %v193, %v191
    %v280 = vpack.c.b16 %v196, %v194
    %v281 = vpack.c.b16 %v197, %v195
    %v282 = vpack.c.b16 %v200, %v198
    %v283 = vpack.c.b16 %v201, %v199
    %v284 = vpack.c.b16 %v204, %v202
    %v285 = vpack.c.b16 %v205, %v203
    %v286 = vpack.c.b16 %v208, %v206
    %v287 = vpack.c.b16 %v209, %v207
    %v288 = vpack.c.b16 %v212, %v210
    %v289 = vpack.c.b16 %v213, %v211
    %v290 = vpack.c.b16 %v216, %v214
    %v291 = vpack.c.b16 %v217, %v215
    %v292 = vpack.c.b16 %v220, %v218
    %v293 = vpack.c.b16 %v221, %v219
    %v294 = vpack.c.b16 %v224, %v222
    %v295 = vpack.c.b16 %v225, %v223
    %v296 = vpack.c.b16 %v228, %v226
    %v297 = vpack.c.b16 %v229, %v227
    %v298 = vpack.c.b16 %v232, %v230
    %v299 = vpack.c.b16 %v233, %v231
    %v300 = vpack.c.b16 %v236, %v234
    %v301 = vpack.c.b16 %v237, %v235
    %v302 = vpack.c.b16 %v240, %v238
    %v303 = vpack.c.b16 %v241, %v239
    %v304 = vpack.c.b16 %v244, %v242
    %v305 = vpack.c.b16 %v245, %v243
    %v306 = vpack.c.b16 %v248, %v246
    %v307 = vpack.c.b16 %v249, %v247
    %v308 = vpack.c.b16 %v252, %v250
    %v309 = vpack.c.b16 %v253, %v251
    %v310 = vpack.c.b16 %v256, %v254
    %v311 = vpack.c.b16 %v257, %v255
    %v312 = vpack.c.b16 %v260, %v258
    %v313 = vpack.c.b16 %v261, %v259
    %v314 = vpack.c.b16 %v264, %v262
    %v315 = vpack.c.b16 %v265, %v263
    %v316 = vpack.c.b16 %v268, %v266
    %v317 = vpack.c.b16 %v269, %v267
    %366 = vmatprep.subr.bf16.mxu0 %v285
    %367 = vmatpush1.bf16.msra.mxu0 %v284
    %368 = vmatprep.subr.bf16.mxu0 %v283
    %369 = vmatpush1.bf16.msra.mxu0 %v282
    %370 = vmatprep.subr.bf16.mxu0 %v281
    %371 = vmatpush1.bf16.msra.mxu0 %v280
    %372 = vmatprep.subr.bf16.mxu0 %v279
    %373 = vmatpush1.bf16.msra.mxu0 %v278
    %374 = vmatprep.subr.bf16.mxu0 %v277
    %375 = vmatpush1.bf16.msra.mxu0 %v276
    %376 = vmatprep.subr.bf16.mxu0 %v275
    %377 = vmatpush1.bf16.msra.mxu0 %v274
    %378 = vmatprep.subr.bf16.mxu0 %v273
    %379 = vmatpush1.bf16.msra.mxu0 %v272
    %380 = vmatprep.subr.bf16.mxu0 %v271
    %381 = vmatpush1.bf16.msra.mxu0 %v270
    %382 = vmatprep.subr.bf16.mxu0 %v301
    %383 = vmatpush2.bf16.msra.mxu0 %v300
    %384 = vmatprep.subr.bf16.mxu0 %v299
    %385 = vmatpush2.bf16.msra.mxu0 %v298
    %386 = vmatprep.subr.bf16.mxu0 %v297
    %387 = vmatpush2.bf16.msra.mxu0 %v296
    %388 = vmatprep.subr.bf16.mxu0 %v295
    %389 = vmatpush2.bf16.msra.mxu0 %v294
    %390 = vmatprep.subr.bf16.mxu0 %v293
    %391 = vmatpush2.bf16.msra.mxu0 %v292
    %392 = vmatprep.subr.bf16.mxu0 %v291
    %393 = vmatpush2.bf16.msra.mxu0 %v290
    %394 = vmatprep.subr.bf16.mxu0 %v289
    %395 = vmatpush2.bf16.msra.mxu0 %v288
    %396 = vmatprep.subr.bf16.mxu0 %v287
    %397 = vmatpush2.bf16.msra.mxu0 %v286
    %398 = vmatprep.mubr.bf16.mxu0 %v121
    %399 = vmatmul.mubr.bf16.gmra.mxu0 %v120
    %v400 = vpop.f32.mrf.mxu0
    %v401 = vadd.f32 %v103, %v400
    %v402 = vpop.f32.mrf.mxu0
    %v403 = vadd.f32 %v107, %v402
    %v404 = vpop.f32.mrf.mxu0
    %v405 = vadd.f32 %v103, %v404
    %v406 = vpop.f32.mrf.mxu0
    %v407 = vadd.f32 %v107, %v406
    %408 = vdwg.mxu0
    %409 = vmatprep.subr.bf16.mxu0 %v317
    %410 = vmatpush1.bf16.msra.mxu0 %v316
    %411 = vmatprep.subr.bf16.mxu0 %v315
    %412 = vmatpush1.bf16.msra.mxu0 %v314
    %413 = vmatprep.subr.bf16.mxu0 %v313
    %414 = vmatpush1.bf16.msra.mxu0 %v312
    %415 = vmatprep.subr.bf16.mxu0 %v311
    %416 = vmatpush1.bf16.msra.mxu0 %v310
    %417 = vmatprep.subr.bf16.mxu0 %v309
    %418 = vmatpush1.bf16.msra.mxu0 %v308
    %419 = vmatprep.subr.bf16.mxu0 %v307
    %420 = vmatpush1.bf16.msra.mxu0 %v306
    %421 = vmatprep.subr.bf16.mxu0 %v305
    %422 = vmatpush1.bf16.msra.mxu0 %v304
    %423 = vmatprep.subr.bf16.mxu0 %v303
    %424 = vmatpush1.bf16.msra.mxu0 %v302
    %425 = vmatprep.subr.bf16.mxu0 0
    %426 = vmatpush2.bf16.msra.mxu0 0
    %427 = vmatprep.subr.bf16.mxu0 0
    %428 = vmatpush2.bf16.msra.mxu0 0
    %429 = vmatprep.subr.bf16.mxu0 0
    %430 = vmatpush2.bf16.msra.mxu0 0
    %431 = vmatprep.subr.bf16.mxu0 0
    %432 = vmatpush2.bf16.msra.mxu0 0
    %433 = vmatprep.subr.bf16.mxu0 0
    %434 = vmatpush2.bf16.msra.mxu0 0
    %435 = vmatprep.subr.bf16.mxu0 0
    %436 = vmatpush2.bf16.msra.mxu0 0
    %437 = vmatprep.subr.bf16.mxu0 0
    %438 = vmatpush2.bf16.msra.mxu0 0
    %439 = vmatprep.subr.bf16.mxu0 0
    %440 = vmatpush2.bf16.msra.mxu0 0
    %441 = vmatprep.mubr.bf16.mxu0 0
    %442 = vmatmul.mubr.bf16.gmra.mxu0 %v122
    %v443 = vpop.f32.mrf.mxu0
    %v444 = vadd.f32 %v401, %v443
    %v445 = vpop.f32.mrf.mxu0
    %v446 = vadd.f32 %v403, %v445
    %v447 = vpop.f32.mrf.mxu0
    %v448 = vadd.f32 %v405, %v447
    %v449 = vpop.f32.mrf.mxu0
    %v450 = vadd.f32 %v407, %v449
    %451 = vdwg.mxu0
    %v452 = vmax.f32 %v444, 0.0
    %v453 = vmax.f32 %v446, 0.0
    %v454 = vmax.f32 %v448, 0.0
    %v455 = vmax.f32 %v450, 0.0
    %v456 = vpack.c.bf16 %v454, %v452
    %v457 = vpack.c.bf16 %v455, %v453
    %v458 = vld [vmem:[#allocation4] sm:$0xf]
    %v459 = vld [vmem:[#allocation4 + $0x4] sm:$0xf]
    %v460 = vld [vmem:[#allocation4 + $0x8] sm:$0xf]
    %v461 = vld [vmem:[#allocation4 + $0xc] sm:$0xf]
    %v462 = vld [vmem:[#allocation4 + $0x10] sm:$0xf]
    %v463 = vld [vmem:[#allocation4 + $0x14] sm:$0xf]
    %v464 = vld [vmem:[#allocation4 + $0x18] sm:$0xf]
    %v465 = vld [vmem:[#allocation4 + $0x1c] sm:$0xf]
    %v466 = vld [vmem:[#allocation4 + $0x20] sm:$0xf]
    %v467 = vld [vmem:[#allocation4 + $0x24] sm:$0xf]
    %v468 = vld [vmem:[#allocation4 + $0x28] sm:$0xf]
    %v469 = vld [vmem:[#allocation4 + $0x2c] sm:$0xf]
    %v470 = vld [vmem:[#allocation4 + $0x30] sm:$0xf]
    %v471 = vld [vmem:[#allocation4 + $0x34] sm:$0xf]
    %v472 = vld [vmem:[#allocation4 + $0x38] sm:$0xf]
    %v473 = vld [vmem:[#allocation4 + $0x3c] sm:$0xf]
    %v474 = vld [vmem:[#allocation4 + $0x40] sm:$0xf]
    %v475 = vld [vmem:[#allocation4 + $0x44] sm:$0xf]
    %v476 = vld [vmem:[#allocation4 + $0x48] sm:$0xf]
    %v477 = vld [vmem:[#allocation4 + $0x4c] sm:$0xf]
    %v478 = vld [vmem:[#allocation4 + $0x50] sm:$0xf]
    %v479 = vld [vmem:[#allocation4 + $0x54] sm:$0xf]
    %v480 = vld [vmem:[#allocation4 + $0x58] sm:$0xf]
    %v481 = vld [vmem:[#allocation4 + $0x5c] sm:$0xf]
    %v482 = vld [vmem:[#allocation4 + $0x60] sm:$0xf]
    %v483 = vld [vmem:[#allocation4 + $0x64] sm:$0xf]
    %v484 = vld [vmem:[#allocation4 + $0x68] sm:$0xf]
    %v485 = vld [vmem:[#allocation4 + $0x6c] sm:$0xf]
    %v486 = vld [vmem:[#allocation4 + $0x70] sm:$0xf]
    %v487 = vld [vmem:[#allocation4 + $0x74] sm:$0xf]
    %v488 = vld [vmem:[#allocation4 + $0x78] sm:$0xf]
    %v489 = vld [vmem:[#allocation4 + $0x7c] sm:$0xf]
    %v490 = vld [vmem:[%s3 + $0x1] sm:$0x1]
    %v491 = vlaneseq
    %v492 = vshrl.u32 %v491, 7
    %v493 = vsub.s32 0, %v492
    %v494 = vrot.slane %v490, %v493
    %v527 = vunpack.c.l.b16 %v458
    %v528 = vunpack.c.l.b16 %v459
    %v529 = vunpack.c.l.b16 %v460
    %v530 = vunpack.c.l.b16 %v461
    %v531 = vunpack.c.l.b16 %v462
    %v532 = vunpack.c.l.b16 %v463
    %v533 = vunpack.c.l.b16 %v464
    %v534 = vunpack.c.l.b16 %v465
    %v535 = vunpack.c.l.b16 %v466
    %v536 = vunpack.c.l.b16 %v467
    %v537 = vunpack.c.l.b16 %v468
    %v538 = vunpack.c.l.b16 %v469
    %v539 = vunpack.c.l.b16 %v470
    %v540 = vunpack.c.l.b16 %v471
    %v541 = vunpack.c.l.b16 %v472
    %v542 = vunpack.c.l.b16 %v473
    %v543 = vunpack.c.l.b16 %v474
    %v544 = vunpack.c.l.b16 %v475
    %v545 = vunpack.c.l.b16 %v476
    %v546 = vunpack.c.l.b16 %v477
    %v547 = vunpack.c.l.b16 %v478
    %v548 = vunpack.c.l.b16 %v479
    %v549 = vunpack.c.l.b16 %v480
    %v550 = vunpack.c.l.b16 %v481
    %v551 = vunpack.c.l.b16 %v482
    %v552 = vunpack.c.l.b16 %v483
    %v553 = vunpack.c.l.b16 %v484
    %v554 = vunpack.c.l.b16 %v485
    %v555 = vunpack.c.l.b16 %v486
    %v556 = vunpack.c.l.b16 %v487
    %v557 = vunpack.c.l.b16 %v488
    %v558 = vunpack.c.l.b16 %v489
    %v559 = vpack.c.b16 %v528, %v527
    %v560 = vpack.c.b16 %v530, %v529
    %v561 = vpack.c.b16 %v532, %v531
    %v562 = vpack.c.b16 %v534, %v533
    %v563 = vpack.c.b16 %v536, %v535
    %v564 = vpack.c.b16 %v538, %v537
    %v565 = vpack.c.b16 %v540, %v539
    %v566 = vpack.c.b16 %v542, %v541
    %v567 = vpack.c.b16 %v544, %v543
    %v568 = vpack.c.b16 %v546, %v545
    %v569 = vpack.c.b16 %v548, %v547
    %v570 = vpack.c.b16 %v550, %v549
    %v571 = vpack.c.b16 %v552, %v551
    %v572 = vpack.c.b16 %v554, %v553
    %v573 = vpack.c.b16 %v556, %v555
    %v574 = vpack.c.b16 %v558, %v557
    %591 = vmatprep.subr.bf16.mxu0 0
    %592 = vmatpush1.bf16.msra.mxu0 %v566
    %593 = vmatprep.subr.bf16.mxu0 0
    %594 = vmatpush1.bf16.msra.mxu0 %v565
    %595 = vmatprep.subr.bf16.mxu0 0
    %596 = vmatpush1.bf16.msra.mxu0 %v564
    %597 = vmatprep.subr.bf16.mxu0 0
    %598 = vmatpush1.bf16.msra.mxu0 %v563
    %599 = vmatprep.subr.bf16.mxu0 0
    %600 = vmatpush1.bf16.msra.mxu0 %v562
    %601 = vmatprep.subr.bf16.mxu0 0
    %602 = vmatpush1.bf16.msra.mxu0 %v561
    %603 = vmatprep.subr.bf16.mxu0 0
    %604 = vmatpush1.bf16.msra.mxu0 %v560
    %605 = vmatprep.subr.bf16.mxu0 0
    %606 = vmatpush1.bf16.msra.mxu0 %v559
    %607 = vmatprep.subr.bf16.mxu0 0
    %608 = vmatpush2.bf16.msra.mxu0 %v574
    %609 = vmatprep.subr.bf16.mxu0 0
    %610 = vmatpush2.bf16.msra.mxu0 %v573
    %611 = vmatprep.subr.bf16.mxu0 0
    %612 = vmatpush2.bf16.msra.mxu0 %v572
    %613 = vmatprep.subr.bf16.mxu0 0
    %614 = vmatpush2.bf16.msra.mxu0 %v571
    %615 = vmatprep.subr.bf16.mxu0 0
    %616 = vmatpush2.bf16.msra.mxu0 %v570
    %617 = vmatprep.subr.bf16.mxu0 0
    %618 = vmatpush2.bf16.msra.mxu0 %v569
    %619 = vmatprep.subr.bf16.mxu0 0
    %620 = vmatpush2.bf16.msra.mxu0 %v568
    %621 = vmatprep.subr.bf16.mxu0 0
    %622 = vmatpush2.bf16.msra.mxu0 %v567
    %623 = vmatprep.mubr.bf16.mxu0 %v457
    %624 = vmatmul.mubr.bf16.gmra.mxu0 %v456
    %v625 = vpop.f32.mrf.mxu0
    %v626 = vadd.f32 %v494, %v625
    %v627 = vpop.f32.mrf.mxu0
    %v628 = vpop.f32.mrf.mxu0
    %v629 = vadd.f32 %v494, %v628
    %v630 = vpop.f32.mrf.mxu0
    %631 = vdwg.mxu0
    %632 = vst [vmem:[%s4] sm:$0xff] %v626
    %633 = vst [vmem:[%s4 + $0x8] sm:$0xff] %v629
    // Predicated region
    $region26: #{multi_encoder_classifier_forward.1} parent=1 // pred_check
      _
    $region27: #{multi_encoder_classifier_forward.1} parent=1 // pred_check_branch
      %635 = sbr.rel (0) target = $region29
    $region28: #{multi_encoder_classifier_forward.1} parent=1 // pred_region
      _
    $region29: #{multi_encoder_classifier_forward.1} parent=1 // pred_fallthru
      _
    // Predicated region
    $region30: #{multi_encoder_classifier_forward.1} parent=1 // pred_check
      _
    $region31: #{multi_encoder_classifier_forward.1} parent=1 // pred_check_branch
      %637 = sbr.rel (0) target = $region33
    $region32: #{multi_encoder_classifier_forward.1} parent=1 // pred_region
      _
    $region33: #{multi_encoder_classifier_forward.1} parent=1 // pred_fallthru
      _
    %638 = vsyncpa [#allocation3], 1
    %639 = vsyncpa [#allocation5], 1

</llo_original>
